<compile_context>
chip_gen: v6e
topology: v6e:2x2x1
jax: 0.10.0
libtpu: 0.0.40
codegen_flags: <defaults>
</compile_context>

<pallas_src>
import jax
import jax.numpy as jnp
from jax.experimental import pallas as pl
from jax.experimental.pallas import tpu as pltpu


def rnn_forward(x, w_ih, w_hh, b_ih, b_hh):
    """x: (T, B, I) float32. Returns (T*B, H) float32 (== out.view(-1, H))."""
    T, B, I = x.shape
    H = w_ih.shape[0]

    # Wrapper-side (XLA) prep: pre-transpose weights, fold biases, flatten x.
    w_ih_t = w_ih.T                      # (I, H)
    w_hh_t = w_hh.T                      # (H, H)
    b = (b_ih + b_hh).reshape(1, H)      # (1, H)
    x2 = x.reshape(T * B, I)             # (T*B, I)

    def kernel(x_ref, wih_t_ref, whh_t_ref, b_ref, out_ref):
        # Hoisted input projection for all time steps: one MXU matmul.
        p = (
            jnp.dot(x_ref[...], wih_t_ref[...], preferred_element_type=jnp.float32)
            + b_ref[...]
        )  # (T*B, H)

        w_hh_t_v = whh_t_ref[...]        # load recurrent weight once
        h = jnp.zeros((B, H), jnp.float32)

        # Sequential recurrence, fully unrolled at trace time (T small, static).
        # h stays in vregs; results are gathered and written back in a single
        # full-slab store.
        outs = []
        for t in range(T):
            p_t = p[t * B:(t + 1) * B, :]                                    # (B, H)
            h = jnp.tanh(
                p_t + jnp.dot(h, w_hh_t_v, preferred_element_type=jnp.float32)
            )
            outs.append(h)

        out_ref[...] = jnp.concatenate(outs, axis=0).astype(out_ref.dtype)   # (T*B, H)

    vmem = pl.BlockSpec(memory_space=pltpu.MemorySpace.VMEM)
    out = pl.pallas_call(
        kernel,
        out_shape=jax.ShapeDtypeStruct((T * B, H), jnp.float32),
        in_specs=[vmem, vmem, vmem, vmem],
        out_specs=vmem,
    )(x2, w_ih_t, w_hh_t, b)

    return out  # already (T*B, H) == out.view(-1, hidden_size)


def rnn_reference(x, w_ih, w_hh, b_ih, b_hh):
    """Pure-JAX reference of the same recurrence (correctness check)."""
    T, B, I = x.shape
    H = w_ih.shape[0]
    h = jnp.zeros((B, H), jnp.float32)
    outs = []
    for t in range(T):
        h = jnp.tanh(x[t] @ w_ih.T + b_ih + h @ w_hh.T + b_hh)
        outs.append(h)
    return jnp.stack(outs, axis=0).reshape(-1, H)


if __name__ == "__main__":
    # Module hyperparameters (from the PyTorch script).
    input_size = 5
    hidden_size = 5
    batch_size = 1
    num_layers = 1   # single layer implemented
    seq_len = 8

    key = jax.random.PRNGKey(0)
    k_x, k_wih, k_whh, k_bih, k_bhh = jax.random.split(key, 5)

    # Deterministic parameter init, mimicking PyTorch's U(-1/sqrt(H), 1/sqrt(H)).
    bound = 1.0 / jnp.sqrt(jnp.float32(hidden_size))
    w_ih = jax.random.uniform(k_wih, (hidden_size, input_size), jnp.float32, -bound, bound)
    w_hh = jax.random.uniform(k_whh, (hidden_size, hidden_size), jnp.float32, -bound, bound)
    b_ih = jax.random.uniform(k_bih, (hidden_size,), jnp.float32, -bound, bound)
    b_hh = jax.random.uniform(k_bhh, (hidden_size,), jnp.float32, -bound, bound)

    # Input in PyTorch RNN's default layout: (seq_len, batch, input_size).
    x = jax.random.normal(k_x, (seq_len, batch_size, input_size), jnp.float32)

    out = rnn_forward(x, w_ih, w_hh, b_ih, b_hh)
    out = jax.block_until_ready(out)

    ref = rnn_reference(x, w_ih, w_hh, b_ih, b_hh)
    assert out.shape == (seq_len * batch_size, hidden_size)
    assert jnp.allclose(out, ref, atol=1e-5, rtol=1e-5)

    print("KERNEL_OK")
</pallas_src>

<mosaic_0001>
module attributes {stable_mosaic.version = 11 : i64} {
  func.func @kernel(%arg0: memref<8x5xf32, #tpu.memory_space<vmem>>, %arg1: memref<5x5xf32, #tpu.memory_space<vmem>>, %arg2: memref<5x5xf32, #tpu.memory_space<vmem>>, %arg3: memref<1x5xf32, #tpu.memory_space<vmem>>, %arg4: memref<8x5xf32, #tpu.memory_space<vmem>>) attributes {dimension_semantics = [], scalar_prefetch = 0 : i64, scratch_operands = 0 : i64, tpu.core_type = #tpu.core_type<tc>} {
    %c0 = arith.constant 0 : index
    %c0_0 = arith.constant 0 : index
    %0 = vector.load %arg0[%c0, %c0_0] : memref<8x5xf32, #tpu.memory_space<vmem>>, vector<8x5xf32>
    %c0_1 = arith.constant 0 : index
    %c0_2 = arith.constant 0 : index
    %1 = vector.load %arg1[%c0_1, %c0_2] : memref<5x5xf32, #tpu.memory_space<vmem>>, vector<5x5xf32>
    %cst = arith.constant dense<0.000000e+00> : vector<8x5xf32>
    %2 = tpu.matmul %0, %1, %cst {dimension_numbers = #tpu.dot_dimension_numbers<[1], [0], [0], [1], [0, 0, 1, 1], [], []>} : vector<8x5xf32>, vector<5x5xf32>, vector<8x5xf32> -> vector<8x5xf32>
    %c0_3 = arith.constant 0 : index
    %c0_4 = arith.constant 0 : index
    %3 = vector.load %arg3[%c0_3, %c0_4] : memref<1x5xf32, #tpu.memory_space<vmem>>, vector<1x5xf32>
    %4 = vector.broadcast %3 : vector<1x5xf32> to vector<8x5xf32>
    %5 = arith.addf %2, %4 : vector<8x5xf32>
    %c0_5 = arith.constant 0 : index
    %c0_6 = arith.constant 0 : index
    %6 = vector.load %arg2[%c0_5, %c0_6] : memref<5x5xf32, #tpu.memory_space<vmem>>, vector<5x5xf32>
    %cst_7 = arith.constant 0.000000e+00 : f32
    %7 = vector.broadcast %cst_7 : f32 to vector<1x5xf32>
    %8 = vector.extract_strided_slice %5 {offsets = [0, 0], sizes = [1, 5], strides = [1, 1]} : vector<8x5xf32> to vector<1x5xf32>
    %cst_8 = arith.constant dense<0.000000e+00> : vector<1x5xf32>
    %9 = tpu.matmul %7, %6, %cst_8 {dimension_numbers = #tpu.dot_dimension_numbers<[1], [0], [0], [1], [0, 0, 1, 1], [], []>} : vector<1x5xf32>, vector<5x5xf32>, vector<1x5xf32> -> vector<1x5xf32>
    %10 = arith.addf %8, %9 : vector<1x5xf32>
    %11 = math.tanh %10 : vector<1x5xf32>
    %12 = vector.extract_strided_slice %5 {offsets = [1, 0], sizes = [1, 5], strides = [1, 1]} : vector<8x5xf32> to vector<1x5xf32>
    %cst_9 = arith.constant dense<0.000000e+00> : vector<1x5xf32>
    %13 = tpu.matmul %11, %6, %cst_9 {dimension_numbers = #tpu.dot_dimension_numbers<[1], [0], [0], [1], [0, 0, 1, 1], [], []>} : vector<1x5xf32>, vector<5x5xf32>, vector<1x5xf32> -> vector<1x5xf32>
    %14 = arith.addf %12, %13 : vector<1x5xf32>
    %15 = math.tanh %14 : vector<1x5xf32>
    %16 = vector.extract_strided_slice %5 {offsets = [2, 0], sizes = [1, 5], strides = [1, 1]} : vector<8x5xf32> to vector<1x5xf32>
    %cst_10 = arith.constant dense<0.000000e+00> : vector<1x5xf32>
    %17 = tpu.matmul %15, %6, %cst_10 {dimension_numbers = #tpu.dot_dimension_numbers<[1], [0], [0], [1], [0, 0, 1, 1], [], []>} : vector<1x5xf32>, vector<5x5xf32>, vector<1x5xf32> -> vector<1x5xf32>
    %18 = arith.addf %16, %17 : vector<1x5xf32>
    %19 = math.tanh %18 : vector<1x5xf32>
    %20 = vector.extract_strided_slice %5 {offsets = [3, 0], sizes = [1, 5], strides = [1, 1]} : vector<8x5xf32> to vector<1x5xf32>
    %cst_11 = arith.constant dense<0.000000e+00> : vector<1x5xf32>
    %21 = tpu.matmul %19, %6, %cst_11 {dimension_numbers = #tpu.dot_dimension_numbers<[1], [0], [0], [1], [0, 0, 1, 1], [], []>} : vector<1x5xf32>, vector<5x5xf32>, vector<1x5xf32> -> vector<1x5xf32>
    %22 = arith.addf %20, %21 : vector<1x5xf32>
    %23 = math.tanh %22 : vector<1x5xf32>
    %24 = vector.extract_strided_slice %5 {offsets = [4, 0], sizes = [1, 5], strides = [1, 1]} : vector<8x5xf32> to vector<1x5xf32>
    %cst_12 = arith.constant dense<0.000000e+00> : vector<1x5xf32>
    %25 = tpu.matmul %23, %6, %cst_12 {dimension_numbers = #tpu.dot_dimension_numbers<[1], [0], [0], [1], [0, 0, 1, 1], [], []>} : vector<1x5xf32>, vector<5x5xf32>, vector<1x5xf32> -> vector<1x5xf32>
    %26 = arith.addf %24, %25 : vector<1x5xf32>
    %27 = math.tanh %26 : vector<1x5xf32>
    %28 = vector.extract_strided_slice %5 {offsets = [5, 0], sizes = [1, 5], strides = [1, 1]} : vector<8x5xf32> to vector<1x5xf32>
    %cst_13 = arith.constant dense<0.000000e+00> : vector<1x5xf32>
    %29 = tpu.matmul %27, %6, %cst_13 {dimension_numbers = #tpu.dot_dimension_numbers<[1], [0], [0], [1], [0, 0, 1, 1], [], []>} : vector<1x5xf32>, vector<5x5xf32>, vector<1x5xf32> -> vector<1x5xf32>
    %30 = arith.addf %28, %29 : vector<1x5xf32>
    %31 = math.tanh %30 : vector<1x5xf32>
    %32 = vector.extract_strided_slice %5 {offsets = [6, 0], sizes = [1, 5], strides = [1, 1]} : vector<8x5xf32> to vector<1x5xf32>
    %cst_14 = arith.constant dense<0.000000e+00> : vector<1x5xf32>
    %33 = tpu.matmul %31, %6, %cst_14 {dimension_numbers = #tpu.dot_dimension_numbers<[1], [0], [0], [1], [0, 0, 1, 1], [], []>} : vector<1x5xf32>, vector<5x5xf32>, vector<1x5xf32> -> vector<1x5xf32>
    %34 = arith.addf %32, %33 : vector<1x5xf32>
    %35 = math.tanh %34 : vector<1x5xf32>
    %36 = vector.extract_strided_slice %5 {offsets = [7, 0], sizes = [1, 5], strides = [1, 1]} : vector<8x5xf32> to vector<1x5xf32>
    %cst_15 = arith.constant dense<0.000000e+00> : vector<1x5xf32>
    %37 = tpu.matmul %35, %6, %cst_15 {dimension_numbers = #tpu.dot_dimension_numbers<[1], [0], [0], [1], [0, 0, 1, 1], [], []>} : vector<1x5xf32>, vector<5x5xf32>, vector<1x5xf32> -> vector<1x5xf32>
    %38 = arith.addf %36, %37 : vector<1x5xf32>
    %39 = math.tanh %38 : vector<1x5xf32>
    %40 = tpu.concatenate %11, %15, %19, %23, %27, %31, %35, %39 in 0 : vector<1x5xf32>, vector<1x5xf32>, vector<1x5xf32>, vector<1x5xf32>, vector<1x5xf32>, vector<1x5xf32>, vector<1x5xf32>, vector<1x5xf32> -> vector<8x5xf32>
    %c0_16 = arith.constant 0 : index
    %c0_17 = arith.constant 0 : index
    %41 = vector.load %arg4[%c0_16, %c0_17] : memref<8x5xf32, #tpu.memory_space<vmem>>, vector<8x5xf32>
    tpu.vector_store %arg4[%c0_16, %c0_17], %40 {strides = array<i32>} : memref<8x5xf32, #tpu.memory_space<vmem>>, vector<8x5xf32>,
    return
  }
}

</mosaic_0001>

<llo_original>
// kernel: tpu_custom_call.1
$region0: #{tpu_custom_call.1}
  #allocation0 [shape = 'u32[]', space=smem, size = 0x4, offset = 0x4, fixed_abs, tag = 'smem constant byte address 0x4 - core index']
  #allocation1 [shape = 'u32[144,128]{1,0:T(1,128)}', space=vmem, size = 0x12000, scoped, tag = 'internal scratch']
  %s0 = inlined_call_operand.hbm [shape: f32[8,5], index: 0, kind: input, shape index: {}]
  %s1 = inlined_call_operand.hbm [shape: f32[5,5], index: 1, kind: input, shape index: {}]
  %s2 = inlined_call_operand.hbm [shape: f32[5,5], index: 2, kind: input, shape index: {}]
  %s3 = inlined_call_operand.vmem [shape: f32[1,5], index: 3, kind: input, shape index: {}]
  %s4 = inlined_call_operand.hbm [shape: f32[8,5], index: 4, kind: output, shape index: {}]
  %s5 = sld [smem:[#allocation0]]
  $region38: #{tpu_custom_call.1} parent=0
    _
  %s7 = ssub.s32 1, %s5
  %s8 = scalar_select 0, %s7, %s5
  $region1: #{tpu_custom_call.1} parent=0
    #allocation2 [shape = 'u8[4096]{0}', space=vmem, size = 0x1000, scoped, tag = 'input window, operand 0, single buffered']
    #allocation3 [shape = 's32[1]{0}', space=sflag, size = 0x4, scoped, tag = 'scoped memory for tpu_custom_call.1']
    #allocation4 [shape = 's32[1]{0}', space=sflag, size = 0x4, scoped, tag = 'scoped memory for tpu_custom_call.1']
    #allocation5 [shape = 'u8[4096]{0}', space=vmem, size = 0x1000, scoped, tag = 'input window, operand 1, single buffered']
    #allocation6 [shape = 's32[1]{0}', space=sflag, size = 0x4, scoped, tag = 'scoped memory for tpu_custom_call.1']
    #allocation7 [shape = 'u8[4096]{0}', space=vmem, size = 0x1000, scoped, tag = 'input window, operand 2, single buffered']
    #allocation8 [shape = 'u8[4096]{0}', space=vmem, size = 0x1000, scoped, tag = 'output window, operand 0, single buffered']
    %9 = vsyncpa [#allocation3], 0
    %10 = vsyncpa [#allocation6], 0
    %11 = vsyncpa [#allocation4], 0
    // Predicated region
    $region2: #{tpu_custom_call.1} parent=1 // pred_check
      _
    $region3: #{tpu_custom_call.1} parent=1 // pred_check_branch
      %13 = sbr.rel (0) target = $region5
    $region4: #{tpu_custom_call.1} parent=1 // pred_region
      %s15 = ssub.s32 128, 128
      %16 = vsyncadd [#allocation3], %s15
      %s18 = sshll.u32 [#allocation2], 4
      %s19 = int_to_ptr.vmem [resolvable:$true] %s18
      %21 = dma.hbm_to_vmem [thread:$0]  %s0, 128, %s19, [#allocation3]
    $region5: #{tpu_custom_call.1} parent=1 // pred_fallthru
      _
    // Predicated region
    $region6: #{tpu_custom_call.1} parent=1 // pred_check
      _
    $region7: #{tpu_custom_call.1} parent=1 // pred_check_branch
      %23 = sbr.rel (0) target = $region9
    $region8: #{tpu_custom_call.1} parent=1 // pred_region
      %s25 = ssub.s32 128, 128
      %26 = vsyncadd [#allocation6], %s25
      %s28 = sshll.u32 [#allocation5], 4
      %s29 = int_to_ptr.vmem [resolvable:$true] %s28
      %31 = dma.hbm_to_vmem [thread:$0]  %s1, 128, %s29, [#allocation6]
    $region9: #{tpu_custom_call.1} parent=1 // pred_fallthru
      _
    // Predicated region
    $region10: #{tpu_custom_call.1} parent=1 // pred_check
      _
    $region11: #{tpu_custom_call.1} parent=1 // pred_check_branch
      %33 = sbr.rel (0) target = $region13
    $region12: #{tpu_custom_call.1} parent=1 // pred_region
      %s35 = ssub.s32 128, 128
      %36 = vsyncadd [#allocation6], %s35
      %s38 = sshll.u32 [#allocation7], 4
      %s39 = int_to_ptr.vmem [resolvable:$true] %s38
      %41 = dma.hbm_to_vmem [thread:$0]  %s2, 128, %s39, [#allocation6]
    $region13: #{tpu_custom_call.1} parent=1 // pred_fallthru
      _
    // Predicated region
    $region14: #{tpu_custom_call.1} parent=1 // pred_check
      _
    $region15: #{tpu_custom_call.1} parent=1 // pred_check_branch
      %43 = sbr.rel (0) target = $region17
    $region16: #{tpu_custom_call.1} parent=1 // pred_region
      _
    $region17: #{tpu_custom_call.1} parent=1 // pred_fallthru
      _
    // Predicated region
    $region18: #{tpu_custom_call.1} parent=1 // pred_check
      _
    $region19: #{tpu_custom_call.1} parent=1 // pred_check_branch
      %45 = sbr.rel (0) target = $region21
    $region20: #{tpu_custom_call.1} parent=1 // pred_region
      %46 = dma.done [#allocation3], 128
    $region21: #{tpu_custom_call.1} parent=1 // pred_fallthru
      _
    // Predicated region
    $region22: #{tpu_custom_call.1} parent=1 // pred_check
      _
    $region23: #{tpu_custom_call.1} parent=1 // pred_check_branch
      %48 = sbr.rel (0) target = $region25
    $region24: #{tpu_custom_call.1} parent=1 // pred_region
      %49 = dma.done [#allocation6], 128
    $region25: #{tpu_custom_call.1} parent=1 // pred_fallthru
      _
    // Predicated region
    $region26: #{tpu_custom_call.1} parent=1 // pred_check
      _
    $region27: #{tpu_custom_call.1} parent=1 // pred_check_branch
      %51 = sbr.rel (0) target = $region29
    $region28: #{tpu_custom_call.1} parent=1 // pred_region
      %52 = dma.done [#allocation6], 128
    $region29: #{tpu_custom_call.1} parent=1 // pred_fallthru
      _
    %v53 = vld [vmem:[#allocation2] sm:$0xff]
    %v54 = vld [vmem:[#allocation5] sm:$0x1f]
    %v55 = vld [vmem:[%s3] sm:$0x1]
    %v57 = vlaneseq
    %v58 = vshrl.u32 %v57, 7
    %v59 = vsub.s32 0, %v58
    %v60 = vrot.slane %v55, %v59
    %vm62 = vcmask 39936
    %v64 = vsel %vm62, %v53, 0
    %vm66 = vcmask 1044480
    %v68 = vsel %vm66, %v54, 0
    %70 = vmatprep.subr.mxu0 0.0
    %71 = vmatpush1.msra.mxu0 0.0
    %72 = vmatprep.subr.mxu0 0.0
    %73 = vmatpush1.msra.mxu0 0.0
    %74 = vmatprep.subr.mxu0 0.0
    %75 = vmatpush1.msra.mxu0 0.0
    %76 = vmatprep.subr.mxu0 0.0
    %77 = vmatpush1.msra.mxu0 0.0
    %78 = vmatprep.subr.mxu0 0.0
    %79 = vmatpush1.msra.mxu0 0.0
    %80 = vmatprep.subr.mxu0 0.0
    %81 = vmatpush1.msra.mxu0 0.0
    %82 = vmatprep.subr.mxu0 0.0
    %83 = vmatpush1.msra.mxu0 0.0
    %84 = vmatprep.subr.mxu0 0.0
    %85 = vmatpush1.msra.mxu0 0.0
    %86 = vmatprep.subr.mxu0 0.0
    %87 = vmatpush1.msra.mxu0 0.0
    %88 = vmatprep.subr.mxu0 0.0
    %89 = vmatpush1.msra.mxu0 0.0
    %90 = vmatprep.subr.mxu0 0.0
    %91 = vmatpush1.msra.mxu0 0.0
    %92 = vmatprep.subr.mxu0 0.0
    %93 = vmatpush1.msra.mxu0 0.0
    %94 = vmatprep.subr.mxu0 0.0
    %95 = vmatpush1.msra.mxu0 0.0
    %96 = vmatprep.subr.mxu0 0.0
    %97 = vmatpush1.msra.mxu0 0.0
    %98 = vmatprep.subr.mxu0 0.0
    %99 = vmatpush1.msra.mxu0 0.0
    %100 = vmatprep.subr.mxu0 0.0
    %101 = vmatpush1.msra.mxu0 %v68
    %102 = vmatprep.subr.mxu0 0.0
    %103 = vmatpush2.msra.mxu0 0.0
    %104 = vmatprep.subr.mxu0 0.0
    %105 = vmatpush2.msra.mxu0 0.0
    %106 = vmatprep.subr.mxu0 0.0
    %107 = vmatpush2.msra.mxu0 0.0
    %108 = vmatprep.subr.mxu0 0.0
    %109 = vmatpush2.msra.mxu0 0.0
    %110 = vmatprep.subr.mxu0 0.0
    %111 = vmatpush2.msra.mxu0 0.0
    %112 = vmatprep.subr.mxu0 0.0
    %113 = vmatpush2.msra.mxu0 0.0
    %114 = vmatprep.subr.mxu0 0.0
    %115 = vmatpush2.msra.mxu0 0.0
    %116 = vmatprep.subr.mxu0 0.0
    %117 = vmatpush2.msra.mxu0 0.0
    %118 = vmatprep.subr.mxu0 0.0
    %119 = vmatpush2.msra.mxu0 0.0
    %120 = vmatprep.subr.mxu0 0.0
    %121 = vmatpush2.msra.mxu0 0.0
    %122 = vmatprep.subr.mxu0 0.0
    %123 = vmatpush2.msra.mxu0 0.0
    %124 = vmatprep.subr.mxu0 0.0
    %125 = vmatpush2.msra.mxu0 0.0
    %126 = vmatprep.subr.mxu0 0.0
    %127 = vmatpush2.msra.mxu0 0.0
    %128 = vmatprep.subr.mxu0 0.0
    %129 = vmatpush2.msra.mxu0 0.0
    %130 = vmatprep.subr.mxu0 0.0
    %131 = vmatpush2.msra.mxu0 0.0
    %132 = vmatprep.subr.mxu0 0.0
    %133 = vmatpush2.msra.mxu0 0.0
    %134 = vmatprep.mubr.f32.mxu0 0.0
    %135 = vmatmul.mubr.f32.gmra.mxu0 %v64
    %v136 = vpop.f32.mrf.mxu0
    %v137 = vadd.f32 %v60, %v136
    %v138 = vpop.f32.mrf.mxu0
    %139 = vdwg.mxu0
    %v140 = vld [vmem:[#allocation7] sm:$0x1f]
    %v142 = vsel %vm62, 0.0, 0
    %v145 = vsel %vm66, %v140, 0
    %147 = vmatprep.subr.mxu0 0.0
    %148 = vmatpush1.msra.mxu0 0.0
    %149 = vmatprep.subr.mxu0 0.0
    %150 = vmatpush1.msra.mxu0 0.0
    %151 = vmatprep.subr.mxu0 0.0
    %152 = vmatpush1.msra.mxu0 0.0
    %153 = vmatprep.subr.mxu0 0.0
    %154 = vmatpush1.msra.mxu0 0.0
    %155 = vmatprep.subr.mxu0 0.0
    %156 = vmatpush1.msra.mxu0 0.0
    %157 = vmatprep.subr.mxu0 0.0
    %158 = vmatpush1.msra.mxu0 0.0
    %159 = vmatprep.subr.mxu0 0.0
    %160 = vmatpush1.msra.mxu0 0.0
    %161 = vmatprep.subr.mxu0 0.0
    %162 = vmatpush1.msra.mxu0 0.0
    %163 = vmatprep.subr.mxu0 0.0
    %164 = vmatpush1.msra.mxu0 0.0
    %165 = vmatprep.subr.mxu0 0.0
    %166 = vmatpush1.msra.mxu0 0.0
    %167 = vmatprep.subr.mxu0 0.0
    %168 = vmatpush1.msra.mxu0 0.0
    %169 = vmatprep.subr.mxu0 0.0
    %170 = vmatpush1.msra.mxu0 0.0
    %171 = vmatprep.subr.mxu0 0.0
    %172 = vmatpush1.msra.mxu0 0.0
    %173 = vmatprep.subr.mxu0 0.0
    %174 = vmatpush1.msra.mxu0 0.0
    %175 = vmatprep.subr.mxu0 0.0
    %176 = vmatpush1.msra.mxu0 0.0
    %177 = vmatprep.subr.mxu0 0.0
    %178 = vmatpush1.msra.mxu0 %v145
    %179 = vmatprep.subr.mxu0 0.0
    %180 = vmatpush2.msra.mxu0 0.0
    %181 = vmatprep.subr.mxu0 0.0
    %182 = vmatpush2.msra.mxu0 0.0
    %183 = vmatprep.subr.mxu0 0.0
    %184 = vmatpush2.msra.mxu0 0.0
    %185 = vmatprep.subr.mxu0 0.0
    %186 = vmatpush2.msra.mxu0 0.0
    %187 = vmatprep.subr.mxu0 0.0
    %188 = vmatpush2.msra.mxu0 0.0
    %189 = vmatprep.subr.mxu0 0.0
    %190 = vmatpush2.msra.mxu0 0.0
    %191 = vmatprep.subr.mxu0 0.0
    %192 = vmatpush2.msra.mxu0 0.0
    %193 = vmatprep.subr.mxu0 0.0
    %194 = vmatpush2.msra.mxu0 0.0
    %195 = vmatprep.subr.mxu0 0.0
    %196 = vmatpush2.msra.mxu0 0.0
    %197 = vmatprep.subr.mxu0 0.0
    %198 = vmatpush2.msra.mxu0 0.0
    %199 = vmatprep.subr.mxu0 0.0
    %200 = vmatpush2.msra.mxu0 0.0
    %201 = vmatprep.subr.mxu0 0.0
    %202 = vmatpush2.msra.mxu0 0.0
    %203 = vmatprep.subr.mxu0 0.0
    %204 = vmatpush2.msra.mxu0 0.0
    %205 = vmatprep.subr.mxu0 0.0
    %206 = vmatpush2.msra.mxu0 0.0
    %207 = vmatprep.subr.mxu0 0.0
    %208 = vmatpush2.msra.mxu0 0.0
    %209 = vmatprep.subr.mxu0 0.0
    %210 = vmatpush2.msra.mxu0 0.0
    %211 = vmatprep.mubr.f32.mxu0 0.0
    %212 = vmatmul.mubr.f32.gmra.mxu0 %v142
    %v213 = vpop.f32.mrf.mxu0
    %v214 = vadd.f32 0.0, %v213
    %v215 = vpop.f32.mrf.mxu0
    %216 = vdwg.mxu0
    %v217 = vadd.f32 %v137, %v214
    %v218 = vtanh.pop %v217
    %v220 = vsel %vm62, %v218, 0
    %222 = vmatprep.subr.mxu0 0.0
    %223 = vmatpush1.msra.mxu0 0.0
    %224 = vmatprep.subr.mxu0 0.0
    %225 = vmatpush1.msra.mxu0 0.0
    %226 = vmatprep.subr.mxu0 0.0
    %227 = vmatpush1.msra.mxu0 0.0
    %228 = vmatprep.subr.mxu0 0.0
    %229 = vmatpush1.msra.mxu0 0.0
    %230 = vmatprep.subr.mxu0 0.0
    %231 = vmatpush1.msra.mxu0 0.0
    %232 = vmatprep.subr.mxu0 0.0
    %233 = vmatpush1.msra.mxu0 0.0
    %234 = vmatprep.subr.mxu0 0.0
    %235 = vmatpush1.msra.mxu0 0.0
    %236 = vmatprep.subr.mxu0 0.0
    %237 = vmatpush1.msra.mxu0 0.0
    %238 = vmatprep.subr.mxu0 0.0
    %239 = vmatpush1.msra.mxu0 0.0
    %240 = vmatprep.subr.mxu0 0.0
    %241 = vmatpush1.msra.mxu0 0.0
    %242 = vmatprep.subr.mxu0 0.0
    %243 = vmatpush1.msra.mxu0 0.0
    %244 = vmatprep.subr.mxu0 0.0
    %245 = vmatpush1.msra.mxu0 0.0
    %246 = vmatprep.subr.mxu0 0.0
    %247 = vmatpush1.msra.mxu0 0.0
    %248 = vmatprep.subr.mxu0 0.0
    %249 = vmatpush1.msra.mxu0 0.0
    %250 = vmatprep.subr.mxu0 0.0
    %251 = vmatpush1.msra.mxu0 0.0
    %252 = vmatprep.subr.mxu0 0.0
    %253 = vmatpush1.msra.mxu0 %v145
    %254 = vmatprep.subr.mxu0 0.0
    %255 = vmatpush2.msra.mxu0 0.0
    %256 = vmatprep.subr.mxu0 0.0
    %257 = vmatpush2.msra.mxu0 0.0
    %258 = vmatprep.subr.mxu0 0.0
    %259 = vmatpush2.msra.mxu0 0.0
    %260 = vmatprep.subr.mxu0 0.0
    %261 = vmatpush2.msra.mxu0 0.0
    %262 = vmatprep.subr.mxu0 0.0
    %263 = vmatpush2.msra.mxu0 0.0
    %264 = vmatprep.subr.mxu0 0.0
    %265 = vmatpush2.msra.mxu0 0.0
    %266 = vmatprep.subr.mxu0 0.0
    %267 = vmatpush2.msra.mxu0 0.0
    %268 = vmatprep.subr.mxu0 0.0
    %269 = vmatpush2.msra.mxu0 0.0
    %270 = vmatprep.subr.mxu0 0.0
    %271 = vmatpush2.msra.mxu0 0.0
    %272 = vmatprep.subr.mxu0 0.0
    %273 = vmatpush2.msra.mxu0 0.0
    %274 = vmatprep.subr.mxu0 0.0
    %275 = vmatpush2.msra.mxu0 0.0
    %276 = vmatprep.subr.mxu0 0.0
    %277 = vmatpush2.msra.mxu0 0.0
    %278 = vmatprep.subr.mxu0 0.0
    %279 = vmatpush2.msra.mxu0 0.0
    %280 = vmatprep.subr.mxu0 0.0
    %281 = vmatpush2.msra.mxu0 0.0
    %282 = vmatprep.subr.mxu0 0.0
    %283 = vmatpush2.msra.mxu0 0.0
    %284 = vmatprep.subr.mxu0 0.0
    %285 = vmatpush2.msra.mxu0 0.0
    %286 = vmatprep.mubr.f32.mxu0 0.0
    %287 = vmatmul.mubr.f32.gmra.mxu0 %v220
    %v288 = vpop.f32.mrf.mxu0
    %v289 = vadd.f32 0.0, %v288
    %v290 = vpop.f32.mrf.mxu0
    %291 = vdwg.mxu0
    %v293 = vrot.slane %v289, 7
    %v295 = vadd.f32 %v137, %v293
    %v296 = vtanh.pop %v295
    %v298 = vrot.slane %v296, 1
    %v299 = vsel %vm62, %v298, 0
    %301 = vmatprep.subr.mxu0 0.0
    %302 = vmatpush1.msra.mxu0 0.0
    %303 = vmatprep.subr.mxu0 0.0
    %304 = vmatpush1.msra.mxu0 0.0
    %305 = vmatprep.subr.mxu0 0.0
    %306 = vmatpush1.msra.mxu0 0.0
    %307 = vmatprep.subr.mxu0 0.0
    %308 = vmatpush1.msra.mxu0 0.0
    %309 = vmatprep.subr.mxu0 0.0
    %310 = vmatpush1.msra.mxu0 0.0
    %311 = vmatprep.subr.mxu0 0.0
    %312 = vmatpush1.msra.mxu0 0.0
    %313 = vmatprep.subr.mxu0 0.0
    %314 = vmatpush1.msra.mxu0 0.0
    %315 = vmatprep.subr.mxu0 0.0
    %316 = vmatpush1.msra.mxu0 0.0
    %317 = vmatprep.subr.mxu0 0.0
    %318 = vmatpush1.msra.mxu0 0.0
    %319 = vmatprep.subr.mxu0 0.0
    %320 = vmatpush1.msra.mxu0 0.0
    %321 = vmatprep.subr.mxu0 0.0
    %322 = vmatpush1.msra.mxu0 0.0
    %323 = vmatprep.subr.mxu0 0.0
    %324 = vmatpush1.msra.mxu0 0.0
    %325 = vmatprep.subr.mxu0 0.0
    %326 = vmatpush1.msra.mxu0 0.0
    %327 = vmatprep.subr.mxu0 0.0
    %328 = vmatpush1.msra.mxu0 0.0
    %329 = vmatprep.subr.mxu0 0.0
    %330 = vmatpush1.msra.mxu0 0.0
    %331 = vmatprep.subr.mxu0 0.0
    %332 = vmatpush1.msra.mxu0 %v145
    %333 = vmatprep.subr.mxu0 0.0
    %334 = vmatpush2.msra.mxu0 0.0
    %335 = vmatprep.subr.mxu0 0.0
    %336 = vmatpush2.msra.mxu0 0.0
    %337 = vmatprep.subr.mxu0 0.0
    %338 = vmatpush2.msra.mxu0 0.0
    %339 = vmatprep.subr.mxu0 0.0
    %340 = vmatpush2.msra.mxu0 0.0
    %341 = vmatprep.subr.mxu0 0.0
    %342 = vmatpush2.msra.mxu0 0.0
    %343 = vmatprep.subr.mxu0 0.0
    %344 = vmatpush2.msra.mxu0 0.0
    %345 = vmatprep.subr.mxu0 0.0
    %346 = vmatpush2.msra.mxu0 0.0
    %347 = vmatprep.subr.mxu0 0.0
    %348 = vmatpush2.msra.mxu0 0.0
    %349 = vmatprep.subr.mxu0 0.0
    %350 = vmatpush2.msra.mxu0 0.0
    %351 = vmatprep.subr.mxu0 0.0
    %352 = vmatpush2.msra.mxu0 0.0
    %353 = vmatprep.subr.mxu0 0.0
    %354 = vmatpush2.msra.mxu0 0.0
    %355 = vmatprep.subr.mxu0 0.0
    %356 = vmatpush2.msra.mxu0 0.0
    %357 = vmatprep.subr.mxu0 0.0
    %358 = vmatpush2.msra.mxu0 0.0
    %359 = vmatprep.subr.mxu0 0.0
    %360 = vmatpush2.msra.mxu0 0.0
    %361 = vmatprep.subr.mxu0 0.0
    %362 = vmatpush2.msra.mxu0 0.0
    %363 = vmatprep.subr.mxu0 0.0
    %364 = vmatpush2.msra.mxu0 0.0
    %365 = vmatprep.mubr.f32.mxu0 0.0
    %366 = vmatmul.mubr.f32.gmra.mxu0 %v299
    %v367 = vpop.f32.mrf.mxu0
    %v368 = vadd.f32 0.0, %v367
    %v369 = vpop.f32.mrf.mxu0
    %370 = vdwg.mxu0
    %v372 = vrot.slane %v368, 6
    %v374 = vadd.f32 %v137, %v372
    %v375 = vtanh.pop %v374
    %v377 = vrot.slane %v375, 2
    %v378 = vsel %vm62, %v377, 0
    %380 = vmatprep.subr.mxu0 0.0
    %381 = vmatpush1.msra.mxu0 0.0
    %382 = vmatprep.subr.mxu0 0.0
    %383 = vmatpush1.msra.mxu0 0.0
    %384 = vmatprep.subr.mxu0 0.0
    %385 = vmatpush1.msra.mxu0 0.0
    %386 = vmatprep.subr.mxu0 0.0
    %387 = vmatpush1.msra.mxu0 0.0
    %388 = vmatprep.subr.mxu0 0.0
    %389 = vmatpush1.msra.mxu0 0.0
    %390 = vmatprep.subr.mxu0 0.0
    %391 = vmatpush1.msra.mxu0 0.0
    %392 = vmatprep.subr.mxu0 0.0
    %393 = vmatpush1.msra.mxu0 0.0
    %394 = vmatprep.subr.mxu0 0.0
    %395 = vmatpush1.msra.mxu0 0.0
    %396 = vmatprep.subr.mxu0 0.0
    %397 = vmatpush1.msra.mxu0 0.0
    %398 = vmatprep.subr.mxu0 0.0
    %399 = vmatpush1.msra.mxu0 0.0
    %400 = vmatprep.subr.mxu0 0.0
    %401 = vmatpush1.msra.mxu0 0.0
    %402 = vmatprep.subr.mxu0 0.0
    %403 = vmatpush1.msra.mxu0 0.0
    %404 = vmatprep.subr.mxu0 0.0
    %405 = vmatpush1.msra.mxu0 0.0
    %406 = vmatprep.subr.mxu0 0.0
    %407 = vmatpush1.msra.mxu0 0.0
    %408 = vmatprep.subr.mxu0 0.0
    %409 = vmatpush1.msra.mxu0 0.0
    %410 = vmatprep.subr.mxu0 0.0
    %411 = vmatpush1.msra.mxu0 %v145
    %412 = vmatprep.subr.mxu0 0.0
    %413 = vmatpush2.msra.mxu0 0.0
    %414 = vmatprep.subr.mxu0 0.0
    %415 = vmatpush2.msra.mxu0 0.0
    %416 = vmatprep.subr.mxu0 0.0
    %417 = vmatpush2.msra.mxu0 0.0
    %418 = vmatprep.subr.mxu0 0.0
    %419 = vmatpush2.msra.mxu0 0.0
    %420 = vmatprep.subr.mxu0 0.0
    %421 = vmatpush2.msra.mxu0 0.0
    %422 = vmatprep.subr.mxu0 0.0
    %423 = vmatpush2.msra.mxu0 0.0
    %424 = vmatprep.subr.mxu0 0.0
    %425 = vmatpush2.msra.mxu0 0.0
    %426 = vmatprep.subr.mxu0 0.0
    %427 = vmatpush2.msra.mxu0 0.0
    %428 = vmatprep.subr.mxu0 0.0
    %429 = vmatpush2.msra.mxu0 0.0
    %430 = vmatprep.subr.mxu0 0.0
    %431 = vmatpush2.msra.mxu0 0.0
    %432 = vmatprep.subr.mxu0 0.0
    %433 = vmatpush2.msra.mxu0 0.0
    %434 = vmatprep.subr.mxu0 0.0
    %435 = vmatpush2.msra.mxu0 0.0
    %436 = vmatprep.subr.mxu0 0.0
    %437 = vmatpush2.msra.mxu0 0.0
    %438 = vmatprep.subr.mxu0 0.0
    %439 = vmatpush2.msra.mxu0 0.0
    %440 = vmatprep.subr.mxu0 0.0
    %441 = vmatpush2.msra.mxu0 0.0
    %442 = vmatprep.subr.mxu0 0.0
    %443 = vmatpush2.msra.mxu0 0.0
    %444 = vmatprep.mubr.f32.mxu0 0.0
    %445 = vmatmul.mubr.f32.gmra.mxu0 %v378
    %v446 = vpop.f32.mrf.mxu0
    %v447 = vadd.f32 0.0, %v446
    %v448 = vpop.f32.mrf.mxu0
    %449 = vdwg.mxu0
    %v451 = vrot.slane %v447, 5
    %v453 = vadd.f32 %v137, %v451
    %v454 = vtanh.pop %v453
    %v456 = vrot.slane %v454, 3
    %v457 = vsel %vm62, %v456, 0
    %459 = vmatprep.subr.mxu0 0.0
    %460 = vmatpush1.msra.mxu0 0.0
    %461 = vmatprep.subr.mxu0 0.0
    %462 = vmatpush1.msra.mxu0 0.0
    %463 = vmatprep.subr.mxu0 0.0
    %464 = vmatpush1.msra.mxu0 0.0
    %465 = vmatprep.subr.mxu0 0.0
    %466 = vmatpush1.msra.mxu0 0.0
    %467 = vmatprep.subr.mxu0 0.0
    %468 = vmatpush1.msra.mxu0 0.0
    %469 = vmatprep.subr.mxu0 0.0
    %470 = vmatpush1.msra.mxu0 0.0
    %471 = vmatprep.subr.mxu0 0.0
    %472 = vmatpush1.msra.mxu0 0.0
    %473 = vmatprep.subr.mxu0 0.0
    %474 = vmatpush1.msra.mxu0 0.0
    %475 = vmatprep.subr.mxu0 0.0
    %476 = vmatpush1.msra.mxu0 0.0
    %477 = vmatprep.subr.mxu0 0.0
    %478 = vmatpush1.msra.mxu0 0.0
    %479 = vmatprep.subr.mxu0 0.0
    %480 = vmatpush1.msra.mxu0 0.0
    %481 = vmatprep.subr.mxu0 0.0
    %482 = vmatpush1.msra.mxu0 0.0
    %483 = vmatprep.subr.mxu0 0.0
    %484 = vmatpush1.msra.mxu0 0.0
    %485 = vmatprep.subr.mxu0 0.0
    %486 = vmatpush1.msra.mxu0 0.0
    %487 = vmatprep.subr.mxu0 0.0
    %488 = vmatpush1.msra.mxu0 0.0
    %489 = vmatprep.subr.mxu0 0.0
    %490 = vmatpush1.msra.mxu0 %v145
    %491 = vmatprep.subr.mxu0 0.0
    %492 = vmatpush2.msra.mxu0 0.0
    %493 = vmatprep.subr.mxu0 0.0
    %494 = vmatpush2.msra.mxu0 0.0
    %495 = vmatprep.subr.mxu0 0.0
    %496 = vmatpush2.msra.mxu0 0.0
    %497 = vmatprep.subr.mxu0 0.0
    %498 = vmatpush2.msra.mxu0 0.0
    %499 = vmatprep.subr.mxu0 0.0
    %500 = vmatpush2.msra.mxu0 0.0
    %501 = vmatprep.subr.mxu0 0.0
    %502 = vmatpush2.msra.mxu0 0.0
    %503 = vmatprep.subr.mxu0 0.0
    %504 = vmatpush2.msra.mxu0 0.0
    %505 = vmatprep.subr.mxu0 0.0
    %506 = vmatpush2.msra.mxu0 0.0
    %507 = vmatprep.subr.mxu0 0.0
    %508 = vmatpush2.msra.mxu0 0.0
    %509 = vmatprep.subr.mxu0 0.0
    %510 = vmatpush2.msra.mxu0 0.0
    %511 = vmatprep.subr.mxu0 0.0
    %512 = vmatpush2.msra.mxu0 0.0
    %513 = vmatprep.subr.mxu0 0.0
    %514 = vmatpush2.msra.mxu0 0.0
    %515 = vmatprep.subr.mxu0 0.0
    %516 = vmatpush2.msra.mxu0 0.0
    %517 = vmatprep.subr.mxu0 0.0
    %518 = vmatpush2.msra.mxu0 0.0
    %519 = vmatprep.subr.mxu0 0.0
    %520 = vmatpush2.msra.mxu0 0.0
    %521 = vmatprep.subr.mxu0 0.0
    %522 = vmatpush2.msra.mxu0 0.0
    %523 = vmatprep.mubr.f32.mxu0 0.0
    %524 = vmatmul.mubr.f32.gmra.mxu0 %v457
    %v525 = vpop.f32.mrf.mxu0
    %v526 = vadd.f32 0.0, %v525
    %v527 = vpop.f32.mrf.mxu0
    %528 = vdwg.mxu0
    %v530 = vrot.slane %v526, 4
    %v532 = vadd.f32 %v137, %v530
    %v533 = vtanh.pop %v532
    %v535 = vrot.slane %v533, 4
    %v536 = vsel %vm62, %v535, 0
    %538 = vmatprep.subr.mxu0 0.0
    %539 = vmatpush1.msra.mxu0 0.0
    %540 = vmatprep.subr.mxu0 0.0
    %541 = vmatpush1.msra.mxu0 0.0
    %542 = vmatprep.subr.mxu0 0.0
    %543 = vmatpush1.msra.mxu0 0.0
    %544 = vmatprep.subr.mxu0 0.0
    %545 = vmatpush1.msra.mxu0 0.0
    %546 = vmatprep.subr.mxu0 0.0
    %547 = vmatpush1.msra.mxu0 0.0
    %548 = vmatprep.subr.mxu0 0.0
    %549 = vmatpush1.msra.mxu0 0.0
    %550 = vmatprep.subr.mxu0 0.0
    %551 = vmatpush1.msra.mxu0 0.0
    %552 = vmatprep.subr.mxu0 0.0
    %553 = vmatpush1.msra.mxu0 0.0
    %554 = vmatprep.subr.mxu0 0.0
    %555 = vmatpush1.msra.mxu0 0.0
    %556 = vmatprep.subr.mxu0 0.0
    %557 = vmatpush1.msra.mxu0 0.0
    %558 = vmatprep.subr.mxu0 0.0
    %559 = vmatpush1.msra.mxu0 0.0
    %560 = vmatprep.subr.mxu0 0.0
    %561 = vmatpush1.msra.mxu0 0.0
    %562 = vmatprep.subr.mxu0 0.0
    %563 = vmatpush1.msra.mxu0 0.0
    %564 = vmatprep.subr.mxu0 0.0
    %565 = vmatpush1.msra.mxu0 0.0
    %566 = vmatprep.subr.mxu0 0.0
    %567 = vmatpush1.msra.mxu0 0.0
    %568 = vmatprep.subr.mxu0 0.0
    %569 = vmatpush1.msra.mxu0 %v145
    %570 = vmatprep.subr.mxu0 0.0
    %571 = vmatpush2.msra.mxu0 0.0
    %572 = vmatprep.subr.mxu0 0.0
    %573 = vmatpush2.msra.mxu0 0.0
    %574 = vmatprep.subr.mxu0 0.0
    %575 = vmatpush2.msra.mxu0 0.0
    %576 = vmatprep.subr.mxu0 0.0
    %577 = vmatpush2.msra.mxu0 0.0
    %578 = vmatprep.subr.mxu0 0.0
    %579 = vmatpush2.msra.mxu0 0.0
    %580 = vmatprep.subr.mxu0 0.0
    %581 = vmatpush2.msra.mxu0 0.0
    %582 = vmatprep.subr.mxu0 0.0
    %583 = vmatpush2.msra.mxu0 0.0
    %584 = vmatprep.subr.mxu0 0.0
    %585 = vmatpush2.msra.mxu0 0.0
    %586 = vmatprep.subr.mxu0 0.0
    %587 = vmatpush2.msra.mxu0 0.0
    %588 = vmatprep.subr.mxu0 0.0
    %589 = vmatpush2.msra.mxu0 0.0
    %590 = vmatprep.subr.mxu0 0.0
    %591 = vmatpush2.msra.mxu0 0.0
    %592 = vmatprep.subr.mxu0 0.0
    %593 = vmatpush2.msra.mxu0 0.0
    %594 = vmatprep.subr.mxu0 0.0
    %595 = vmatpush2.msra.mxu0 0.0
    %596 = vmatprep.subr.mxu0 0.0
    %597 = vmatpush2.msra.mxu0 0.0
    %598 = vmatprep.subr.mxu0 0.0
    %599 = vmatpush2.msra.mxu0 0.0
    %600 = vmatprep.subr.mxu0 0.0
    %601 = vmatpush2.msra.mxu0 0.0
    %602 = vmatprep.mubr.f32.mxu0 0.0
    %603 = vmatmul.mubr.f32.gmra.mxu0 %v536
    %v604 = vpop.f32.mrf.mxu0
    %v605 = vadd.f32 0.0, %v604
    %v606 = vpop.f32.mrf.mxu0
    %607 = vdwg.mxu0
    %v609 = vrot.slane %v605, 3
    %v611 = vadd.f32 %v137, %v609
    %v612 = vtanh.pop %v611
    %v614 = vrot.slane %v612, 5
    %v615 = vsel %vm62, %v614, 0
    %617 = vmatprep.subr.mxu0 0.0
    %618 = vmatpush1.msra.mxu0 0.0
    %619 = vmatprep.subr.mxu0 0.0
    %620 = vmatpush1.msra.mxu0 0.0
    %621 = vmatprep.subr.mxu0 0.0
    %622 = vmatpush1.msra.mxu0 0.0
    %623 = vmatprep.subr.mxu0 0.0
    %624 = vmatpush1.msra.mxu0 0.0
    %625 = vmatprep.subr.mxu0 0.0
    %626 = vmatpush1.msra.mxu0 0.0
    %627 = vmatprep.subr.mxu0 0.0
    %628 = vmatpush1.msra.mxu0 0.0
    %629 = vmatprep.subr.mxu0 0.0
    %630 = vmatpush1.msra.mxu0 0.0
    %631 = vmatprep.subr.mxu0 0.0
    %632 = vmatpush1.msra.mxu0 0.0
    %633 = vmatprep.subr.mxu0 0.0
    %634 = vmatpush1.msra.mxu0 0.0
    %635 = vmatprep.subr.mxu0 0.0
    %636 = vmatpush1.msra.mxu0 0.0
    %637 = vmatprep.subr.mxu0 0.0
    %638 = vmatpush1.msra.mxu0 0.0
    %639 = vmatprep.subr.mxu0 0.0
    %640 = vmatpush1.msra.mxu0 0.0
    %641 = vmatprep.subr.mxu0 0.0
    %642 = vmatpush1.msra.mxu0 0.0
    %643 = vmatprep.subr.mxu0 0.0
    %644 = vmatpush1.msra.mxu0 0.0
    %645 = vmatprep.subr.mxu0 0.0
    %646 = vmatpush1.msra.mxu0 0.0
    %647 = vmatprep.subr.mxu0 0.0
    %648 = vmatpush1.msra.mxu0 %v145
    %649 = vmatprep.subr.mxu0 0.0
    %650 = vmatpush2.msra.mxu0 0.0
    %651 = vmatprep.subr.mxu0 0.0
    %652 = vmatpush2.msra.mxu0 0.0
    %653 = vmatprep.subr.mxu0 0.0
    %654 = vmatpush2.msra.mxu0 0.0
    %655 = vmatprep.subr.mxu0 0.0
    %656 = vmatpush2.msra.mxu0 0.0
    %657 = vmatprep.subr.mxu0 0.0
    %658 = vmatpush2.msra.mxu0 0.0
    %659 = vmatprep.subr.mxu0 0.0
    %660 = vmatpush2.msra.mxu0 0.0
    %661 = vmatprep.subr.mxu0 0.0
    %662 = vmatpush2.msra.mxu0 0.0
    %663 = vmatprep.subr.mxu0 0.0
    %664 = vmatpush2.msra.mxu0 0.0
    %665 = vmatprep.subr.mxu0 0.0
    %666 = vmatpush2.msra.mxu0 0.0
    %667 = vmatprep.subr.mxu0 0.0
    %668 = vmatpush2.msra.mxu0 0.0
    %669 = vmatprep.subr.mxu0 0.0
    %670 = vmatpush2.msra.mxu0 0.0
    %671 = vmatprep.subr.mxu0 0.0
    %672 = vmatpush2.msra.mxu0 0.0
    %673 = vmatprep.subr.mxu0 0.0
    %674 = vmatpush2.msra.mxu0 0.0
    %675 = vmatprep.subr.mxu0 0.0
    %676 = vmatpush2.msra.mxu0 0.0
    %677 = vmatprep.subr.mxu0 0.0
    %678 = vmatpush2.msra.mxu0 0.0
    %679 = vmatprep.subr.mxu0 0.0
    %680 = vmatpush2.msra.mxu0 0.0
    %681 = vmatprep.mubr.f32.mxu0 0.0
    %682 = vmatmul.mubr.f32.gmra.mxu0 %v615
    %v683 = vpop.f32.mrf.mxu0
    %v684 = vadd.f32 0.0, %v683
    %v685 = vpop.f32.mrf.mxu0
    %686 = vdwg.mxu0
    %v688 = vrot.slane %v684, 2
    %v690 = vadd.f32 %v137, %v688
    %v691 = vtanh.pop %v690
    %v693 = vrot.slane %v691, 6
    %v694 = vsel %vm62, %v693, 0
    %696 = vmatprep.subr.mxu0 0.0
    %697 = vmatpush1.msra.mxu0 0.0
    %698 = vmatprep.subr.mxu0 0.0
    %699 = vmatpush1.msra.mxu0 0.0
    %700 = vmatprep.subr.mxu0 0.0
    %701 = vmatpush1.msra.mxu0 0.0
    %702 = vmatprep.subr.mxu0 0.0
    %703 = vmatpush1.msra.mxu0 0.0
    %704 = vmatprep.subr.mxu0 0.0
    %705 = vmatpush1.msra.mxu0 0.0
    %706 = vmatprep.subr.mxu0 0.0
    %707 = vmatpush1.msra.mxu0 0.0
    %708 = vmatprep.subr.mxu0 0.0
    %709 = vmatpush1.msra.mxu0 0.0
    %710 = vmatprep.subr.mxu0 0.0
    %711 = vmatpush1.msra.mxu0 0.0
    %712 = vmatprep.subr.mxu0 0.0
    %713 = vmatpush1.msra.mxu0 0.0
    %714 = vmatprep.subr.mxu0 0.0
    %715 = vmatpush1.msra.mxu0 0.0
    %716 = vmatprep.subr.mxu0 0.0
    %717 = vmatpush1.msra.mxu0 0.0
    %718 = vmatprep.subr.mxu0 0.0
    %719 = vmatpush1.msra.mxu0 0.0
    %720 = vmatprep.subr.mxu0 0.0
    %721 = vmatpush1.msra.mxu0 0.0
    %722 = vmatprep.subr.mxu0 0.0
    %723 = vmatpush1.msra.mxu0 0.0
    %724 = vmatprep.subr.mxu0 0.0
    %725 = vmatpush1.msra.mxu0 0.0
    %726 = vmatprep.subr.mxu0 0.0
    %727 = vmatpush1.msra.mxu0 %v145
    %728 = vmatprep.subr.mxu0 0.0
    %729 = vmatpush2.msra.mxu0 0.0
    %730 = vmatprep.subr.mxu0 0.0
    %731 = vmatpush2.msra.mxu0 0.0
    %732 = vmatprep.subr.mxu0 0.0
    %733 = vmatpush2.msra.mxu0 0.0
    %734 = vmatprep.subr.mxu0 0.0
    %735 = vmatpush2.msra.mxu0 0.0
    %736 = vmatprep.subr.mxu0 0.0
    %737 = vmatpush2.msra.mxu0 0.0
    %738 = vmatprep.subr.mxu0 0.0
    %739 = vmatpush2.msra.mxu0 0.0
    %740 = vmatprep.subr.mxu0 0.0
    %741 = vmatpush2.msra.mxu0 0.0
    %742 = vmatprep.subr.mxu0 0.0
    %743 = vmatpush2.msra.mxu0 0.0
    %744 = vmatprep.subr.mxu0 0.0
    %745 = vmatpush2.msra.mxu0 0.0
    %746 = vmatprep.subr.mxu0 0.0
    %747 = vmatpush2.msra.mxu0 0.0
    %748 = vmatprep.subr.mxu0 0.0
    %749 = vmatpush2.msra.mxu0 0.0
    %750 = vmatprep.subr.mxu0 0.0
    %751 = vmatpush2.msra.mxu0 0.0
    %752 = vmatprep.subr.mxu0 0.0
    %753 = vmatpush2.msra.mxu0 0.0
    %754 = vmatprep.subr.mxu0 0.0
    %755 = vmatpush2.msra.mxu0 0.0
    %756 = vmatprep.subr.mxu0 0.0
    %757 = vmatpush2.msra.mxu0 0.0
    %758 = vmatprep.subr.mxu0 0.0
    %759 = vmatpush2.msra.mxu0 0.0
    %760 = vmatprep.mubr.f32.mxu0 0.0
    %761 = vmatmul.mubr.f32.gmra.mxu0 %v694
    %v762 = vpop.f32.mrf.mxu0
    %v763 = vadd.f32 0.0, %v762
    %v764 = vpop.f32.mrf.mxu0
    %765 = vdwg.mxu0
    %v767 = vrot.slane %v763, 1
    %v769 = vadd.f32 %v137, %v767
    %v770 = vtanh.pop %v769
    %vm771 = vcmask 1040384
    %v772 = vsel %vm771, %v218, %v296
    %vm773 = vcmask 1041408
    %v774 = vsel %vm773, %v772, %v375
    %vm775 = vcmask 1042432
    %v776 = vsel %vm775, %v774, %v454
    %vm777 = vcmask 1043456
    %v778 = vsel %vm777, %v776, %v533
    %v779 = vsel %vm66, %v778, %v612
    %vm780 = vcmask 1045504
    %v781 = vsel %vm780, %v779, %v691
    %vm782 = vcmask 1046528
    %v783 = vsel %vm782, %v781, %v770
    %784 = vst.msk [vmem:[#allocation8] sm:$0xff] %vm62, %v783
    // Predicated region
    $region30: #{tpu_custom_call.1} parent=1 // pred_check
      _
    $region31: #{tpu_custom_call.1} parent=1 // pred_check_branch
      %786 = sbr.rel (0) target = $region33
    $region32: #{tpu_custom_call.1} parent=1 // pred_region
      %s788 = ssub.s32 128, 128
      %789 = vsyncadd [#allocation4], %s788
      %s791 = sshll.u32 [#allocation8], 4
      %s792 = int_to_ptr.vmem [resolvable:$true] %s791
      %794 = dma.vmem_to_hbm [thread:$0]  %s792, 128, %s4, [#allocation4]
    $region33: #{tpu_custom_call.1} parent=1 // pred_fallthru
      _
    // Predicated region
    $region34: #{tpu_custom_call.1} parent=1 // pred_check
      _
    $region35: #{tpu_custom_call.1} parent=1 // pred_check_branch
      %796 = sbr.rel (0) target = $region37
    $region36: #{tpu_custom_call.1} parent=1 // pred_region
      %797 = dma.done [#allocation4], 128
    $region37: #{tpu_custom_call.1} parent=1 // pred_fallthru
      _
    %798 = vsyncpa [#allocation3], 1
    %799 = vsyncpa [#allocation6], 1
    %800 = vsyncpa [#allocation4], 1

</llo_original>
